<compile_context>
chip_gen: v7x
topology: tpu7x:2x2x1
jax: 0.10.0
libtpu: 0.0.40
codegen_flags: <defaults>
</compile_context>

<pallas_src>
import math
from functools import partial

import numpy as np
import jax
import jax.numpy as jnp
from jax.experimental import pallas as pl
from jax.experimental.pallas import tpu as pltpu

_TILE_N = 256  # output-row tile (M dim of the MXU matmul)


def _round_up(x, m):
    return (x + m - 1) // m * m


def _conv_kernel(map_ref, feat_ref, w_ref, out_ref, *, mode):
    """One grid step (i = N tile, j = kernel offset):

        out[i] += gather(feats, nbr_map[j, i]) @ W[j]

    map block  : (1, tile_n, 1) int32      (-1 => no neighbor)
    feat block : (N_pad, Cin_pad) f32      resident across the whole grid
    w block    : (1, Cin_pad, Cout_pad) bf16, pipelined per offset
    out block  : (tile_n, Cout_pad) f32    resident accumulator across j
    """

    @pl.when(pl.program_id(1) == 0)
    def _():
        out_ref[...] = jnp.zeros_like(out_ref)

    idx = map_ref[0]                          # (tile_n, 1) int32
    feats = feat_ref[...]                     # (N_pad, Cin_pad) float32

    if mode == "gather":
        # Real gather: tpu.dynamic_gather along the sublane (row) axis.
        safe = jnp.broadcast_to(jnp.maximum(idx, 0),
                                (idx.shape[0], feats.shape[1]))     # int32
        g = jnp.take_along_axis(feats, safe, axis=0,
                                mode="promise_in_bounds")           # (tile_n, Cin)
        g = jnp.where(idx >= 0, g, 0.0)                             # mask -1 rows
    else:
        # Fallback: one-hot gather on the MXU, built directly in bf16
        # (0/1 exactly representable), one-hot shape (tile_n, N_pad).
        cols = jax.lax.broadcasted_iota(
            jnp.int32, (idx.shape[0], feats.shape[0]), 1)
        onehot = (idx == cols).astype(jnp.bfloat16)
        g = jnp.dot(onehot, feats.astype(jnp.bfloat16),
                    preferred_element_type=jnp.float32)             # (tile_n, Cin)

    # Channel matmul in bf16 on the MXU, f32 accumulation into the resident tile.
    out_ref[...] += jnp.dot(g.astype(jnp.bfloat16), w_ref[0],
                            preferred_element_type=jnp.float32)


def _sparse_conv3d_call(mode, feats_pad, nbr_map, w_bf16, tile_n):
    k, n_pad, _ = nbr_map.shape
    cin_pad = feats_pad.shape[1]
    cout_pad = w_bf16.shape[2]
    kern = partial(_conv_kernel, mode=mode)

    grid = (n_pad // tile_n, k)                                  # K (reduction) last
    map_spec = pl.BlockSpec((1, tile_n, 1), lambda i, j: (j, i, 0))
    feat_spec = pl.BlockSpec((n_pad, cin_pad), lambda i, j: (0, 0))     # resident
    w_spec = pl.BlockSpec((1, cin_pad, cout_pad), lambda i, j: (j, 0, 0))
    out_spec = pl.BlockSpec((tile_n, cout_pad), lambda i, j: (i, 0))

    return pl.pallas_call(
        kern,
        out_shape=jax.ShapeDtypeStruct((n_pad, cout_pad), jnp.float32),
        grid_spec=pltpu.PrefetchScalarGridSpec(
            num_scalar_prefetch=0,
            grid=grid,
            in_specs=[map_spec, feat_spec, w_spec],
            out_specs=out_spec,
        ),
        compiler_params=pltpu.CompilerParams(
            dimension_semantics=("parallel", "arbitrary"),
            vmem_limit_bytes=64 * 1024 * 1024,
        ),
    )(nbr_map, feats_pad, w_bf16)


def sparse_conv3d_pallas(feats_pad, nbr_map, w_bf16, tile_n):
    try:
        out = _sparse_conv3d_call("gather", feats_pad, nbr_map, w_bf16, tile_n)
        return jax.block_until_ready(out)
    except Exception:
        # Mosaic on this JAX version rejected the dynamic-gather lowering;
        # fall back to the tiled one-hot MXU gather (correct, bf16, same grid).
        out = _sparse_conv3d_call("onehot", feats_pad, nbr_map, w_bf16, tile_n)
        return jax.block_until_ready(out)


class SparseDynamicConv3d:
    """JAX/Pallas port of the PyTorch SparseDynamicConv3d (forward only)."""

    def __init__(self, inc, outc, kernel_size=3, stride=1, dilation=1,
                 transposed=False, key=None):
        # TODO(synk): stride>1 / transposed sparse conv change the output
        # coordinate set; this port implements the stride=1, non-transposed
        # (submanifold) path.
        assert stride == 1 and not transposed
        self.inc, self.outc = inc, outc
        self.ks = kernel_size
        self.k = kernel_size ** 3
        self.s, self.d, self.t = stride, dilation, transposed
        std = 1.0 / math.sqrt(self.outc if self.t else self.inc * self.k)
        if key is None:
            key = jax.random.PRNGKey(0)
        shape = (self.k, inc, outc) if self.k > 1 else (inc, outc)
        self.kernel = jax.random.uniform(key, shape, jnp.float32, -std, std)
        self.runtime_inc = None
        self.runtime_outc = None
        self.runtime_inc_constraint = None

    def set_in_channel(self, in_channel=None, constraint=None):
        if in_channel is not None:
            self.runtime_inc = in_channel
        elif constraint is not None:
            self.runtime_inc_constraint = jnp.asarray(np.array(constraint), jnp.int32)
        else:
            raise NotImplementedError

    def set_output_channel(self, channel):
        self.runtime_outc = channel

    def _build_neighbor_map(self, coords, n_pad):
        # Kernel offsets in lexicographic order over (-r..r)^3 (synthetic
        # convention; torchsparse's exact offset ordering only permutes the K
        # axis of the weight).  Host-side rulebook build, analogous to
        # torchsparse's kmap construction.
        coords = np.asarray(coords)
        n = coords.shape[0]
        r = self.ks // 2
        lut = {tuple(int(v) for v in c): i for i, c in enumerate(coords)}
        nmap = -np.ones((self.k, n_pad), dtype=np.int32)
        offs = [(dx, dy, dz)
                for dx in range(-r, r + 1)
                for dy in range(-r, r + 1)
                for dz in range(-r, r + 1)]
        for j, (dx, dy, dz) in enumerate(offs):
            for i in range(n):
                b, x, y, z = (int(v) for v in coords[i])
                nmap[j, i] = lut.get(
                    (b, x + dx * self.d, y + dy * self.d, z + dz * self.d), -1)
        return nmap

    def __call__(self, features, coords):
        # runtime channel slicing (the "dynamic" part of the module)
        cur_kernel = self.kernel
        if self.runtime_inc_constraint is not None:
            cur_kernel = (cur_kernel[:, self.runtime_inc_constraint, :]
                          if self.ks > 1 else cur_kernel[self.runtime_inc_constraint])
        elif self.runtime_inc is not None:
            cur_kernel = (cur_kernel[:, :self.runtime_inc, :]
                          if self.ks > 1 else cur_kernel[:self.runtime_inc])
        else:
            raise AssertionError("Number of channels not specified!")
        cur_kernel = cur_kernel[..., :self.runtime_outc]
        if self.ks == 1:
            cur_kernel = cur_kernel[None]

        n, rin = features.shape
        rout = cur_kernel.shape[-1]

        n_pad = _round_up(max(n, 8), 128)
        if n_pad > _TILE_N:
            n_pad = _round_up(n_pad, _TILE_N)
        tile_n = min(_TILE_N, n_pad)
        cin_pad = _round_up(rin, 128)
        cout_pad = _round_up(rout, 128)

        feats_pad = jnp.zeros((n_pad, cin_pad), jnp.float32).at[:n, :rin].set(
            features.astype(jnp.float32))
        w_pad = jnp.zeros((self.k, cin_pad, cout_pad), jnp.float32).at[
            :, :rin, :rout].set(cur_kernel.astype(jnp.float32))
        w_bf16 = w_pad.astype(jnp.bfloat16)
        nmap = jnp.asarray(self._build_neighbor_map(coords, n_pad)).reshape(
            self.k, n_pad, 1)

        out_pad = sparse_conv3d_pallas(feats_pad, nmap, w_bf16, tile_n)
        return out_pad[:n, :rout]


if __name__ == "__main__":
    key = jax.random.PRNGKey(0)
    k_w, k_c, k_f = jax.random.split(key, 3)

    inc, outc = 8, 16          # max channel capacities of the dynamic conv
    rin, rout = 4, 8           # runtime (active) channels
    batch, grid_size, pts_per_batch = 2, 6, 60

    # random sparse voxel coordinates (batch, x, y, z), deduplicated
    raw = jax.random.randint(k_c, (batch * pts_per_batch, 3), 0, grid_size)
    bidx = jnp.repeat(jnp.arange(batch), pts_per_batch)[:, None]
    coords = np.unique(
        np.concatenate([np.asarray(bidx), np.asarray(raw)], axis=1), axis=0)
    n = coords.shape[0]

    feats = jax.random.normal(k_f, (n, rin), jnp.float32)

    conv = SparseDynamicConv3d(inc, outc, kernel_size=3, key=k_w)
    conv.set_in_channel(in_channel=rin)
    conv.set_output_channel(rout)

    out = conv(feats, coords)
    out = jax.block_until_ready(out)

    # plain-JAX/numpy reference matching the kernel's numerics:
    # bf16-rounded features/weights, exact gather, f32 accumulation.
    nmap_ref = conv._build_neighbor_map(coords, n)                     # (K, N)
    w_ref = np.asarray(
        conv.kernel[:, :rin, :rout].astype(jnp.bfloat16).astype(jnp.float32))
    f_bf = np.asarray(feats.astype(jnp.bfloat16).astype(jnp.float32))
    gathered = np.where(nmap_ref[..., None] >= 0,
                        f_bf[np.clip(nmap_ref, 0, None)], 0.0)
    ref = np.einsum('knc,kcd->nd', gathered, w_ref)

    assert out.shape == (n, rout)
    np.testing.assert_allclose(np.asarray(out), ref, rtol=1e-4, atol=1e-4)
    print("KERNEL_OK")
</pallas_src>

<mosaic_0001>
module attributes {stable_mosaic.version = 11 : i64} {
  func.func @_conv_kernel(%arg0: i32, %arg1: i32, %arg2: memref<1x128x1xi32, #tpu.memory_space<vmem>>, %arg3: memref<128x128xf32, #tpu.memory_space<vmem>>, %arg4: memref<1x128x128xbf16, #tpu.memory_space<vmem>>, %arg5: memref<128x128xf32, #tpu.memory_space<vmem>>) attributes {dimension_semantics = [#tpu.dimension_semantics<parallel>, #tpu.dimension_semantics<arbitrary>], iteration_bounds = array<i64: 1, 27>, scalar_prefetch = 0 : i64, scratch_operands = 0 : i64, tpu.core_type = #tpu.core_type<tc>, window_params = [{transform_indices = @transform_0, window_bounds = array<i64: 1, 128, 1>}, {pipeline_mode = #tpu.pipeline_mode<synchronous>, transform_indices = @transform_1, window_bounds = array<i64: 128, 128>}, {transform_indices = @transform_2, window_bounds = array<i64: 1, 128, 128>}, {transform_indices = @transform_3, window_bounds = array<i64: 128, 128>}]} {
    %c0_i32 = arith.constant 0 : i32
    %0 = arith.cmpi eq, %arg1, %c0_i32 : i32
    %1 = arith.extui %0 : i1 to i32
    %c0_i32_0 = arith.constant 0 : i32
    %2 = arith.cmpi ne, %1, %c0_i32_0 : i32
    scf.if %2 {
      %cst_15 = arith.constant 0.000000e+00 : f32
      %26 = vector.broadcast %cst_15 : f32 to vector<128x128xf32>
      %c0_16 = arith.constant 0 : index
      %c0_17 = arith.constant 0 : index
      %27 = vector.load %arg5[%c0_16, %c0_17] : memref<128x128xf32, #tpu.memory_space<vmem>>, vector<128x128xf32>
      tpu.vector_store %arg5[%c0_16, %c0_17], %26 {strides = array<i32>} : memref<128x128xf32, #tpu.memory_space<vmem>>, vector<128x128xf32>,
    } else {
    }
    %c0 = arith.constant 0 : index
    %c0_1 = arith.constant 0 : index
    %c0_2 = arith.constant 0 : index
    %3 = vector.load %arg2[%c0, %c0_1, %c0_2] : memref<1x128x1xi32, #tpu.memory_space<vmem>>, vector<1x128x1xi32>
    %4 = vector.shape_cast %3 : vector<1x128x1xi32> to vector<128x1xi32>
    %c0_3 = arith.constant 0 : index
    %c0_4 = arith.constant 0 : index
    %5 = vector.load %arg3[%c0_3, %c0_4] : memref<128x128xf32, #tpu.memory_space<vmem>>, vector<128x128xf32>
    %c0_i32_5 = arith.constant 0 : i32
    %6 = vector.broadcast %c0_i32_5 : i32 to vector<128x1xi32>
    %7 = arith.maxsi %4, %6 : vector<128x1xi32>
    %8 = vector.shape_cast %7 : vector<128x1xi32> to vector<128x1xi32>
    %9 = vector.broadcast %8 : vector<128x1xi32> to vector<128x128xi32>
    %10 = vector.shape_cast %9 : vector<128x128xi32> to vector<128x128x1xi32>
    %11 = vector.shape_cast %10 : vector<128x128x1xi32> to vector<128x128xi32>
    %12 = tpu.dynamic_gather %5[%11] in [0] : vector<128x128xf32>, vector<128x128xi32> -> vector<128x128xf32>
    %c0_i32_6 = arith.constant 0 : i32
    %13 = vector.broadcast %c0_i32_6 : i32 to vector<128x1xi32>
    %14 = arith.cmpi sge, %4, %13 : vector<128x1xi32>
    %cst = arith.constant 0.000000e+00 : f32
    %15 = vector.shape_cast %14 : vector<128x1xi1> to vector<128x1xi1>
    %16 = vector.broadcast %15 : vector<128x1xi1> to vector<128x128xi1>
    %17 = vector.broadcast %cst : f32 to vector<128x128xf32>
    %18 = arith.select %16, %12, %17 : vector<128x128xi1>, vector<128x128xf32>
    %c0_7 = arith.constant 0 : index
    %c0_8 = arith.constant 0 : index
    %19 = vector.load %arg5[%c0_7, %c0_8] : memref<128x128xf32, #tpu.memory_space<vmem>>, vector<128x128xf32>
    %20 = arith.truncf %18 : vector<128x128xf32> to vector<128x128xbf16>
    %c0_9 = arith.constant 0 : index
    %c0_10 = arith.constant 0 : index
    %c0_11 = arith.constant 0 : index
    %21 = vector.load %arg4[%c0_9, %c0_10, %c0_11] : memref<1x128x128xbf16, #tpu.memory_space<vmem>>, vector<1x128x128xbf16>
    %22 = vector.shape_cast %21 : vector<1x128x128xbf16> to vector<128x128xbf16>
    %cst_12 = arith.constant dense<0.000000e+00> : vector<128x128xf32>
    %23 = tpu.matmul %20, %22, %cst_12 {dimension_numbers = #tpu.dot_dimension_numbers<[1], [0], [0], [1], [0, 0, 1, 1], [], []>} : vector<128x128xbf16>, vector<128x128xbf16>, vector<128x128xf32> -> vector<128x128xf32>
    %24 = arith.addf %19, %23 : vector<128x128xf32>
    %c0_13 = arith.constant 0 : index
    %c0_14 = arith.constant 0 : index
    %25 = vector.load %arg5[%c0_13, %c0_14] : memref<128x128xf32, #tpu.memory_space<vmem>>, vector<128x128xf32>
    tpu.vector_store %arg5[%c0_13, %c0_14], %24 {strides = array<i32>} : memref<128x128xf32, #tpu.memory_space<vmem>>, vector<128x128xf32>,
    return
  }
  func.func @transform_0(%arg0: i32, %arg1: i32) -> (i32, i32, i32) {
    %c0_i32 = arith.constant 0 : i32
    %c0_i32_0 = arith.constant 0 : i32
    return %arg1, %arg0, %c0_i32 : i32, i32, i32
  }
  func.func @transform_1(%arg0: i32, %arg1: i32) -> (i32, i32) {
    %c0_i32 = arith.constant 0 : i32
    %c0_i32_0 = arith.constant 0 : i32
    %c0_i32_1 = arith.constant 0 : i32
    return %c0_i32, %c0_i32_0 : i32, i32
  }
  func.func @transform_2(%arg0: i32, %arg1: i32) -> (i32, i32, i32) {
    %c0_i32 = arith.constant 0 : i32
    %c0_i32_0 = arith.constant 0 : i32
    %c0_i32_1 = arith.constant 0 : i32
    return %arg1, %c0_i32, %c0_i32_0 : i32, i32, i32
  }
  func.func @transform_3(%arg0: i32, %arg1: i32) -> (i32, i32) {
    %c0_i32 = arith.constant 0 : i32
    %c0_i32_0 = arith.constant 0 : i32
    return %arg0, %c0_i32 : i32, i32
  }
}

module attributes {stable_mosaic.version = 11 : i64} {
  func.func @_conv_kernel(%arg0: i32, %arg1: i32, %arg2: memref<1x128x1xi32, #tpu.memory_space<vmem>>, %arg3: memref<128x128xf32, #tpu.memory_space<vmem>>, %arg4: memref<1x128x128xbf16, #tpu.memory_space<vmem>>, %arg5: memref<128x128xf32, #tpu.memory_space<vmem>>) attributes {dimension_semantics = [#tpu.dimension_semantics<parallel>, #tpu.dimension_semantics<arbitrary>], iteration_bounds = array<i64: 1, 27>, scalar_prefetch = 0 : i64, scratch_operands = 0 : i64, tpu.core_type = #tpu.core_type<tc>, window_params = [{transform_indices = @transform_0, window_bounds = array<i64: 1, 128, 1>}, {pipeline_mode = #tpu.pipeline_mode<synchronous>, transform_indices = @transform_1, window_bounds = array<i64: 128, 128>}, {transform_indices = @transform_2, window_bounds = array<i64: 1, 128, 128>}, {transform_indices = @transform_3, window_bounds = array<i64: 128, 128>}]} {
    %c0_i32 = arith.constant 0 : i32
    %0 = arith.cmpi eq, %arg1, %c0_i32 : i32
    %1 = arith.extui %0 : i1 to i32
    %c0_i32_0 = arith.constant 0 : i32
    %2 = arith.cmpi ne, %1, %c0_i32_0 : i32
    scf.if %2 {
      %cst_13 = arith.constant 0.000000e+00 : f32
      %21 = vector.broadcast %cst_13 : f32 to vector<128x128xf32>
      %c0_14 = arith.constant 0 : index
      %c0_15 = arith.constant 0 : index
      %22 = vector.load %arg5[%c0_14, %c0_15] : memref<128x128xf32, #tpu.memory_space<vmem>>, vector<128x128xf32>
      tpu.vector_store %arg5[%c0_14, %c0_15], %21 {strides = array<i32>} : memref<128x128xf32, #tpu.memory_space<vmem>>, vector<128x128xf32>,
    } else {
    }
    %c0 = arith.constant 0 : index
    %c0_1 = arith.constant 0 : index
    %c0_2 = arith.constant 0 : index
    %3 = vector.load %arg2[%c0, %c0_1, %c0_2] : memref<1x128x1xi32, #tpu.memory_space<vmem>>, vector<1x128x1xi32>
    %4 = vector.shape_cast %3 : vector<1x128x1xi32> to vector<128x1xi32>
    %c0_3 = arith.constant 0 : index
    %c0_4 = arith.constant 0 : index
    %5 = vector.load %arg3[%c0_3, %c0_4] : memref<128x128xf32, #tpu.memory_space<vmem>>, vector<128x128xf32>
    %6 = tpu.iota {dimensions = array<i32: 1>} : vector<128x128xi32>
    %7 = vector.broadcast %4 : vector<128x1xi32> to vector<128x128xi32>
    %8 = arith.cmpi eq, %7, %6 : vector<128x128xi32>
    %9 = arith.extui %8 : vector<128x128xi1> to vector<128x128xi32>
    %10 = arith.sitofp %9 : vector<128x128xi32> to vector<128x128xf32>
    %11 = arith.truncf %10 : vector<128x128xf32> to vector<128x128xbf16>
    %12 = arith.truncf %5 : vector<128x128xf32> to vector<128x128xbf16>
    %cst = arith.constant dense<0.000000e+00> : vector<128x128xf32>
    %13 = tpu.matmul %11, %12, %cst {dimension_numbers = #tpu.dot_dimension_numbers<[1], [0], [0], [1], [0, 0, 1, 1], [], []>} : vector<128x128xbf16>, vector<128x128xbf16>, vector<128x128xf32> -> vector<128x128xf32>
    %c0_5 = arith.constant 0 : index
    %c0_6 = arith.constant 0 : index
    %14 = vector.load %arg5[%c0_5, %c0_6] : memref<128x128xf32, #tpu.memory_space<vmem>>, vector<128x128xf32>
    %15 = arith.truncf %13 : vector<128x128xf32> to vector<128x128xbf16>
    %c0_7 = arith.constant 0 : index
    %c0_8 = arith.constant 0 : index
    %c0_9 = arith.constant 0 : index
    %16 = vector.load %arg4[%c0_7, %c0_8, %c0_9] : memref<1x128x128xbf16, #tpu.memory_space<vmem>>, vector<1x128x128xbf16>
    %17 = vector.shape_cast %16 : vector<1x128x128xbf16> to vector<128x128xbf16>
    %cst_10 = arith.constant dense<0.000000e+00> : vector<128x128xf32>
    %18 = tpu.matmul %15, %17, %cst_10 {dimension_numbers = #tpu.dot_dimension_numbers<[1], [0], [0], [1], [0, 0, 1, 1], [], []>} : vector<128x128xbf16>, vector<128x128xbf16>, vector<128x128xf32> -> vector<128x128xf32>
    %19 = arith.addf %14, %18 : vector<128x128xf32>
    %c0_11 = arith.constant 0 : index
    %c0_12 = arith.constant 0 : index
    %20 = vector.load %arg5[%c0_11, %c0_12] : memref<128x128xf32, #tpu.memory_space<vmem>>, vector<128x128xf32>
    tpu.vector_store %arg5[%c0_11, %c0_12], %19 {strides = array<i32>} : memref<128x128xf32, #tpu.memory_space<vmem>>, vector<128x128xf32>,
    return
  }
  func.func @transform_0(%arg0: i32, %arg1: i32) -> (i32, i32, i32) {
    %c0_i32 = arith.constant 0 : i32
    %c0_i32_0 = arith.constant 0 : i32
    return %arg1, %arg0, %c0_i32 : i32, i32, i32
  }
  func.func @transform_1(%arg0: i32, %arg1: i32) -> (i32, i32) {
    %c0_i32 = arith.constant 0 : i32
    %c0_i32_0 = arith.constant 0 : i32
    %c0_i32_1 = arith.constant 0 : i32
    return %c0_i32, %c0_i32_0 : i32, i32
  }
  func.func @transform_2(%arg0: i32, %arg1: i32) -> (i32, i32, i32) {
    %c0_i32 = arith.constant 0 : i32
    %c0_i32_0 = arith.constant 0 : i32
    %c0_i32_1 = arith.constant 0 : i32
    return %arg1, %c0_i32, %c0_i32_0 : i32, i32, i32
  }
  func.func @transform_3(%arg0: i32, %arg1: i32) -> (i32, i32) {
    %c0_i32 = arith.constant 0 : i32
    %c0_i32_0 = arith.constant 0 : i32
    return %arg0, %c0_i32 : i32, i32
  }
}

</mosaic_0001>

<llo_original>
// kernel: tpu_custom_call.1
$region0: #{tpu_custom_call.1}
  #allocation0 [shape = 'u32[]', space=smem, size = 0x4, offset = 0x4, fixed_abs, tag = 'smem constant byte address 0x4 - core index']
  #allocation1 [shape = 'u32[144,128]{1,0:T(1,128)}', space=vmem, size = 0x12000, scoped, tag = 'internal scratch']
  %s0 = inlined_call_operand.hbm [shape: s32[27,128,1], index: 0, kind: input, shape index: {}]
  %s1 = inlined_call_operand.hbm [shape: f32[128,128], index: 1, kind: input, shape index: {}]
  %s2 = inlined_call_operand.hbm [shape: bf16[27,128,128], index: 2, kind: input, shape index: {}]
  %s3 = inlined_call_operand.hbm [shape: f32[128,128], index: 3, kind: output, shape index: {}]
  %s4 = sld [smem:[#allocation0]]
  $region61: #{tpu_custom_call.1} parent=0
    _
  %s6 = ssub.s32 1, %s4
  %s7 = scalar_select 0, %s6, %s4
  $region1: #{tpu_custom_call.1} parent=0
    #allocation2 [shape = 'u8[131072]{0}', space=vmem, size = 0x20000, scoped, tag = 'input window, operand 0']
    #allocation3 [shape = 's32[2]{0}', space=sflag, size = 0x8, scoped, tag = 'scoped memory for tpu_custom_call.1']
    #allocation4 [shape = 's32[2]{0}', space=sflag, size = 0x8, scoped, tag = 'scoped memory for tpu_custom_call.1']
    #allocation5 [shape = 'u8[65536]{0}', space=vmem, size = 0x10000, scoped, tag = 'input window, operand 1, single buffered']
    #allocation6 [shape = 's32[1]{0}', space=sflag, size = 0x4, scoped, tag = 'scoped memory for tpu_custom_call.1']
    #allocation7 [shape = 'u8[65536]{0}', space=vmem, size = 0x10000, scoped, tag = 'input window, operand 2']
    #allocation8 [shape = 'u8[65536]{0}', space=vmem, size = 0x10000, scoped, tag = 'output window, operand 0, single buffered']
    %8 = vsyncpa [#allocation3], 0
    %s9 = scalar_lea.sflag [#allocation3], 1
    %10 = vsyncpa %s9, 0
    %11 = vsyncpa [#allocation6], 0
    %12 = vsyncpa [#allocation4], 0
    loop: start=0, step=1, limit=29
    $region2: #{tpu_custom_call.1} parent=1 // loop_pre_header
      _
    $region3: #{tpu_custom_call.1} parent=1 // loop_header
      %s14 = sphi 0, %s18
      %p15 = scmp.ge.s32.totalorder %s14, 29
      %s21 = sphi 0, %s33
      %s22 = sphi 0, %s29
      %s23 = sphi 0, %s21
      %s24 = sphi 0, %s22
      %s25 = sphi 0, %s23
      %s26 = sphi 0, %s24
      %s38 = sphi 0, %s40
      %s41 = sphi 0, %s38
      %s42 = sphi 0, %s41
      %s58 = sphi 0, %s42
      %s62 = sphi 0, %s62
      %s64 = sphi 0, %s62
      %s65 = sphi 0, %s64
      %s79 = sphi 0, %s65
      %s85 = sphi 0, %s87
      %s88 = sphi 0, %s85
      %s89 = sphi 0, %s88
      %s105 = sphi 0, %s89
      %s111 = sphi 0, %s113
      %s114 = sphi 0, %s111
      %s115 = sphi 0, %s114
      %s131 = sphi 0, %s115
    $region4: #{tpu_custom_call.1} parent=1 // loop_header_branch
      %17 = sbr.rel (%p15) target = $region8
    $region5: #{tpu_custom_call.1} parent=1 // loop_body
      %s19 = ssub.s32 %s14, 1
      %s20 = ssub.s32 %s14, 2
      %s27 = sadd.s32 1, %s22
      %p28 = scmp.ge.s32.totalorder %s27, 27
      %s29 = scalar_select %p28, 0, %s27
      %s30 = sadd.s32 1, %s21
      %s31 = scalar_select %p28, %s30, %s21
      %p32 = scmp.ge.s32.totalorder %s31, 1
      %s33 = scalar_select %p32, 0, %s31
      %s34 = ssub.s32 %s22, %s29
      %s35 = ssub.s32 %s21, %s33
      %s36 = sor.u32 %s34, %s35
      %p37 = scmp.eq.s32.totalorder %s36, 0
      %s39 = sadd.s32 %s38, 1
      %s40 = scalar_select %p37, %s38, %s39
      %p43 = pneg %p37
      %p44 = scmp.eq.s32.totalorder %s14, 26
      %p45 = por %p43, %p44
      %p46 = scmp.ne.s32.totalorder %s38, %s41
      %p47 = scmp.eq.s32.totalorder %s14, 0
      %p48 = por %p46, %p47
      %p49 = scmp.ne.s32.totalorder %s38, %s41
      %p50 = scmp.eq.s32.totalorder %s19, 26
      %p51 = por %p49, %p50
      %p52 = scmp.ne.s32.totalorder %s41, %s42
      %p53 = scmp.eq.s32.totalorder %s19, 0
      %p54 = por %p52, %p53
      %p55 = scmp.ne.s32.totalorder %s41, %s42
      %p56 = scmp.eq.s32.totalorder %s20, 26
      %p57 = por %p55, %p56
      %p59 = scmp.ne.s32.totalorder %s42, %s58
      %p60 = scmp.eq.s32.totalorder %s20, 0
      %p61 = por %p59, %p60
      %s63 = sadd.s32 %s62, 1
      %p66 = scmp.eq.s32.totalorder %s14, 26
      %p67 = scmp.ne.s32.totalorder %s62, %s64
      %p68 = scmp.eq.s32.totalorder %s14, 0
      %p69 = por %p67, %p68
      %p70 = scmp.ne.s32.totalorder %s62, %s64
      %p71 = scmp.eq.s32.totalorder %s19, 26
      %p72 = por %p70, %p71
      %p73 = scmp.ne.s32.totalorder %s64, %s65
      %p74 = scmp.eq.s32.totalorder %s19, 0
      %p75 = por %p73, %p74
      %p76 = scmp.ne.s32.totalorder %s64, %s65
      %p77 = scmp.eq.s32.totalorder %s20, 26
      %p78 = por %p76, %p77
      %p80 = scmp.ne.s32.totalorder %s65, %s79
      %p81 = scmp.eq.s32.totalorder %s20, 0
      %p82 = por %p80, %p81
      %s83 = ssub.s32 %s22, %s29
      %p84 = scmp.eq.s32.totalorder %s83, 0
      %s86 = sadd.s32 %s85, 1
      %s87 = scalar_select %p84, %s85, %s86
      %p90 = pneg %p84
      %p91 = scmp.eq.s32.totalorder %s14, 26
      %p92 = por %p90, %p91
      %p93 = scmp.ne.s32.totalorder %s85, %s88
      %p94 = scmp.eq.s32.totalorder %s14, 0
      %p95 = por %p93, %p94
      %p96 = scmp.ne.s32.totalorder %s85, %s88
      %p97 = scmp.eq.s32.totalorder %s19, 26
      %p98 = por %p96, %p97
      %p99 = scmp.ne.s32.totalorder %s88, %s89
      %p100 = scmp.eq.s32.totalorder %s19, 0
      %p101 = por %p99, %p100
      %p102 = scmp.ne.s32.totalorder %s88, %s89
      %p103 = scmp.eq.s32.totalorder %s20, 26
      %p104 = por %p102, %p103
      %p106 = scmp.ne.s32.totalorder %s89, %s105
      %p107 = scmp.eq.s32.totalorder %s20, 0
      %p108 = por %p106, %p107
      %s109 = ssub.s32 %s21, %s33
      %p110 = scmp.eq.s32.totalorder %s109, 0
      %s112 = sadd.s32 %s111, 1
      %s113 = scalar_select %p110, %s111, %s112
      %p116 = pneg %p110
      %p117 = scmp.eq.s32.totalorder %s14, 26
      %p118 = por %p116, %p117
      %p119 = scmp.ne.s32.totalorder %s111, %s114
      %p120 = scmp.eq.s32.totalorder %s14, 0
      %p121 = por %p119, %p120
      %p122 = scmp.ne.s32.totalorder %s111, %s114
      %p123 = scmp.eq.s32.totalorder %s19, 26
      %p124 = por %p122, %p123
      %p125 = scmp.ne.s32.totalorder %s114, %s115
      %p126 = scmp.eq.s32.totalorder %s19, 0
      %p127 = por %p125, %p126
      %p128 = scmp.ne.s32.totalorder %s114, %s115
      %p129 = scmp.eq.s32.totalorder %s20, 26
      %p130 = por %p128, %p129
      %p132 = scmp.ne.s32.totalorder %s115, %s131
      %p133 = scmp.eq.s32.totalorder %s20, 0
      %p134 = por %p132, %p133
      %p135 = scmp.le.s32.totalorder 1, %s14
      %p136 = scmp.lt.s32.totalorder %s14, 28
      %p137 = pnand %p135, %p136
      %p138 = pneg %p137
      // Predicated region
      $region9: #{tpu_custom_call.1} parent=5 // pred_check
        _
      $region10: #{tpu_custom_call.1} parent=5 // pred_check_branch
        %140 = sbr.rel (%p137) target = $region12
      $region11: #{tpu_custom_call.1} parent=5 // pred_region
        %s141 = ssub.s32 %s14, 1
        // Predicated region
        $region13: #{tpu_custom_call.1} parent=11 // pred_check
          %p142 = pneg %p75
        $region14: #{tpu_custom_call.1} parent=11 // pred_check_branch
          %144 = sbr.rel (%p142) target = $region16
        $region15: #{tpu_custom_call.1} parent=11 // pred_region
          %s146 = ssub.s32 2048, 2048
          %147 = vsyncadd [#allocation6], %s146
          %s148 = sshll.u32 [#allocation5], 4
          %s149 = int_to_ptr.vmem [resolvable:$true] %s148
          %154 = dma.hbm_to_vmem [thread:$0]  %s1, 2048, %s149, [#allocation6], 128, 128, 8
        $region16: #{tpu_custom_call.1} parent=11 // pred_fallthru
          _
      $region12: #{tpu_custom_call.1} parent=5 // pred_fallthru
        _
      %p155 = scmp.lt.s32.totalorder %s14, 27
      // Predicated region
      $region17: #{tpu_custom_call.1} parent=5 // pred_check
        %p156 = pneg %p155
      $region18: #{tpu_custom_call.1} parent=5 // pred_check_branch
        %158 = sbr.rel (%p156) target = $region20
      $region19: #{tpu_custom_call.1} parent=5 // pred_region
        // Predicated region
        $region21: #{tpu_custom_call.1} parent=19 // pred_check
          %p159 = pneg %p48
        $region22: #{tpu_custom_call.1} parent=19 // pred_check_branch
          %161 = sbr.rel (%p159) target = $region24
        $region23: #{tpu_custom_call.1} parent=19 // pred_region
          %s162 = sand.u32 %s14, 1
          %s163 = scalar_lea.sflag [#allocation3], %s162
          %s164 = sand.u32 %s38, 1
          %s165 = smul.addr %s164, 128
          %s166 = scalar_lea.vmem [#allocation2], %s165
          %s167 = smul.u32 16, %s21
          %s169 = ssub.s32 2048, 2048
          %170 = vsyncadd %s163, %s169
          %s171 = smul.addr %s22, 16
          %s172 = sadd.s32 %s167, %s171
          %s173 = smul.addr %s172, 128
          %s174 = scalar_lea.hbm %s0, %s173
          %s175 = sshll.u32 %s166, 4
          %s176 = int_to_ptr.vmem [resolvable:$true] %s175
          %181 = dma.hbm_to_vmem [thread:$0]  %s174, 2048, %s176, %s163, 128, 128, 8
        $region24: #{tpu_custom_call.1} parent=19 // pred_fallthru
          _
        // Predicated region
        $region25: #{tpu_custom_call.1} parent=19 // pred_check
          %p182 = pneg %p95
        $region26: #{tpu_custom_call.1} parent=19 // pred_check_branch
          %184 = sbr.rel (%p182) target = $region28
        $region27: #{tpu_custom_call.1} parent=19 // pred_region
          %s185 = sand.u32 %s14, 1
          %s186 = scalar_lea.sflag [#allocation3], %s185
          %s187 = sand.u32 %s85, 1
          %s188 = smul.addr %s187, 64
          %s189 = scalar_lea.vmem [#allocation7], %s188
          %s191 = ssub.s32 1024, 1024
          %192 = vsyncadd %s186, %s191
          %s193 = smul.addr %s22, 16
          %s194 = smul.addr %s193, 64
          %s195 = scalar_lea.hbm %s2, %s194
          %s196 = sshll.u32 %s189, 4
          %s197 = int_to_ptr.vmem [resolvable:$true] %s196
          %202 = dma.hbm_to_vmem [thread:$0]  %s195, 1024, %s197, %s186, 64, 64, 4
        $region28: #{tpu_custom_call.1} parent=19 // pred_fallthru
          _
      $region20: #{tpu_custom_call.1} parent=5 // pred_fallthru
        _
      %p203 = scmp.le.s32.totalorder 1, %s14
      %p204 = scmp.lt.s32.totalorder %s14, 28
      %p205 = pnand %p203, %p204
      %p206 = pneg %p205
      // Predicated region
      $region29: #{tpu_custom_call.1} parent=5 // pred_check
        _
      $region30: #{tpu_custom_call.1} parent=5 // pred_check_branch
        %208 = sbr.rel (%p205) target = $region32
      $region31: #{tpu_custom_call.1} parent=5 // pred_region
        %s209 = ssub.s32 %s14, 1
        %s210 = sand.u32 %s19, 1
        %s211 = scalar_lea.sflag [#allocation3], %s210
        %s212 = sand.u32 %s41, 1
        %s213 = smul.addr %s212, 128
        %s214 = scalar_lea.vmem [#allocation2], %s213
        // Predicated region
        $region33: #{tpu_custom_call.1} parent=31 // pred_check
          %p215 = pneg %p54
        $region34: #{tpu_custom_call.1} parent=31 // pred_check_branch
          %217 = sbr.rel (%p215) target = $region36
        $region35: #{tpu_custom_call.1} parent=31 // pred_region
          %218 = dma.done %s211, 2048
        $region36: #{tpu_custom_call.1} parent=31 // pred_fallthru
          _
        // Predicated region
        $region37: #{tpu_custom_call.1} parent=31 // pred_check
          %p219 = pneg %p75
        $region38: #{tpu_custom_call.1} parent=31 // pred_check_branch
          %221 = sbr.rel (%p219) target = $region40
        $region39: #{tpu_custom_call.1} parent=31 // pred_region
          %222 = dma.done [#allocation6], 2048
        $region40: #{tpu_custom_call.1} parent=31 // pred_fallthru
          _
        %s223 = sand.u32 %s19, 1
        %s224 = scalar_lea.sflag [#allocation3], %s223
        %s225 = sand.u32 %s88, 1
        %s226 = smul.addr %s225, 64
        %s227 = scalar_lea.vmem [#allocation7], %s226
        // Predicated region
        $region41: #{tpu_custom_call.1} parent=31 // pred_check
          %p228 = pneg %p101
        $region42: #{tpu_custom_call.1} parent=31 // pred_check_branch
          %230 = sbr.rel (%p228) target = $region44
        $region43: #{tpu_custom_call.1} parent=31 // pred_region
          %231 = dma.done %s224, 1024
        $region44: #{tpu_custom_call.1} parent=31 // pred_fallthru
          _
        %s232 = sand.u32 %s19, 1
        %s233 = scalar_lea.sflag [#allocation3], %s232
        %s234 = sand.u32 %s41, 1
        %s235 = smul.addr %s234, 128
        %s236 = scalar_lea.vmem [#allocation2], %s235
        %p237 = pneg %p54
        %p238 = pneg %p51
        %p239 = pneg %p75
        %p240 = pneg %p72
        %s241 = sand.u32 %s19, 1
        %s242 = scalar_lea.sflag [#allocation3], %s241
        %s243 = sand.u32 %s88, 1
        %s244 = smul.addr %s243, 64
        %s245 = scalar_lea.vmem [#allocation7], %s244
        %p246 = pneg %p101
        %p247 = pneg %p98
        %p248 = pneg %p127
        %p249 = pneg %p124
        %s250 = smul.u32 16, %s23
        %s251 = smul.u32 16, %s23
        %p253 = scmp.eq.s32.totalorder %s24, 0
        // Predicated region
        $region45: #{tpu_custom_call.1} parent=31 // pred_check
          %p254 = pneg %p253
        $region46: #{tpu_custom_call.1} parent=31 // pred_check_branch
          %256 = sbr.rel (%p254) target = $region48
        $region47: #{tpu_custom_call.1} parent=31 // pred_region
          %257 = vst [vmem:[#allocation8] sm:$0xff] 0.0
          %258 = vst [vmem:[#allocation8 + $0x8] sm:$0xff] 0.0
          %259 = vst [vmem:[#allocation8 + $0x10] sm:$0xff] 0.0
          %260 = vst [vmem:[#allocation8 + $0x18] sm:$0xff] 0.0
          %261 = vst [vmem:[#allocation8 + $0x20] sm:$0xff] 0.0
          %262 = vst [vmem:[#allocation8 + $0x28] sm:$0xff] 0.0
          %263 = vst [vmem:[#allocation8 + $0x30] sm:$0xff] 0.0
          %264 = vst [vmem:[#allocation8 + $0x38] sm:$0xff] 0.0
          %265 = vst [vmem:[#allocation8 + $0x40] sm:$0xff] 0.0
          %266 = vst [vmem:[#allocation8 + $0x48] sm:$0xff] 0.0
          %267 = vst [vmem:[#allocation8 + $0x50] sm:$0xff] 0.0
          %268 = vst [vmem:[#allocation8 + $0x58] sm:$0xff] 0.0
          %269 = vst [vmem:[#allocation8 + $0x60] sm:$0xff] 0.0
          %270 = vst [vmem:[#allocation8 + $0x68] sm:$0xff] 0.0
          %271 = vst [vmem:[#allocation8 + $0x70] sm:$0xff] 0.0
          %272 = vst [vmem:[#allocation8 + $0x78] sm:$0xff] 0.0
        $region48: #{tpu_custom_call.1} parent=31 // pred_fallthru
          _
        %v273 = vld [vmem:[%s214] sm:$0xff]
        %v274 = vld [vmem:[%s214 + $0x8] sm:$0xff]
        %v275 = vld [vmem:[%s214 + $0x10] sm:$0xff]
        %v276 = vld [vmem:[%s214 + $0x18] sm:$0xff]
        %v277 = vld [vmem:[%s214 + $0x20] sm:$0xff]
        %v278 = vld [vmem:[%s214 + $0x28] sm:$0xff]
        %v279 = vld [vmem:[%s214 + $0x30] sm:$0xff]
        %v280 = vld [vmem:[%s214 + $0x38] sm:$0xff]
        %v281 = vld [vmem:[%s214 + $0x40] sm:$0xff]
        %v282 = vld [vmem:[%s214 + $0x48] sm:$0xff]
        %v283 = vld [vmem:[%s214 + $0x50] sm:$0xff]
        %v284 = vld [vmem:[%s214 + $0x58] sm:$0xff]
        %v285 = vld [vmem:[%s214 + $0x60] sm:$0xff]
        %v286 = vld [vmem:[%s214 + $0x68] sm:$0xff]
        %v287 = vld [vmem:[%s214 + $0x70] sm:$0xff]
        %v288 = vld [vmem:[%s214 + $0x78] sm:$0xff]
        %v289 = vld [vmem:[#allocation5] sm:$0xff]
        %v290 = vld [vmem:[#allocation5 + $0x8] sm:$0xff]
        %v291 = vld [vmem:[#allocation5 + $0x10] sm:$0xff]
        %v292 = vld [vmem:[#allocation5 + $0x18] sm:$0xff]
        %v293 = vld [vmem:[#allocation5 + $0x20] sm:$0xff]
        %v294 = vld [vmem:[#allocation5 + $0x28] sm:$0xff]
        %v295 = vld [vmem:[#allocation5 + $0x30] sm:$0xff]
        %v296 = vld [vmem:[#allocation5 + $0x38] sm:$0xff]
        %v297 = vld [vmem:[#allocation5 + $0x40] sm:$0xff]
        %v298 = vld [vmem:[#allocation5 + $0x48] sm:$0xff]
        %v299 = vld [vmem:[#allocation5 + $0x50] sm:$0xff]
        %v300 = vld [vmem:[#allocation5 + $0x58] sm:$0xff]
        %v301 = vld [vmem:[#allocation5 + $0x60] sm:$0xff]
        %v302 = vld [vmem:[#allocation5 + $0x68] sm:$0xff]
        %v303 = vld [vmem:[#allocation5 + $0x70] sm:$0xff]
        %v304 = vld [vmem:[#allocation5 + $0x78] sm:$0xff]
        %v305 = vlaneseq
        %v306 = vand.u32 %v305, 127
        %307 = vset.pattern.permute.xlu0 0
        %308 = vperm.xlu0 %307, %v273
        %v309 = vpop.permute.xlu0 %308
        %310 = vset.pattern.permute.xlu0 0
        %311 = vperm.xlu0 %310, %v274
        %v312 = vpop.permute.xlu0 %311
        %313 = vset.pattern.permute.xlu0 0
        %314 = vperm.xlu0 %313, %v275
        %v315 = vpop.permute.xlu0 %314
        %316 = vset.pattern.permute.xlu0 0
        %317 = vperm.xlu0 %316, %v276
        %v318 = vpop.permute.xlu0 %317
        %319 = vset.pattern.permute.xlu0 0
        %320 = vperm.xlu0 %319, %v277
        %v321 = vpop.permute.xlu0 %320
        %322 = vset.pattern.permute.xlu0 0
        %323 = vperm.xlu0 %322, %v278
        %v324 = vpop.permute.xlu0 %323
        %325 = vset.pattern.permute.xlu0 0
        %326 = vperm.xlu0 %325, %v279
        %v327 = vpop.permute.xlu0 %326
        %328 = vset.pattern.permute.xlu0 0
        %329 = vperm.xlu0 %328, %v280
        %v330 = vpop.permute.xlu0 %329
        %331 = vset.pattern.permute.xlu0 0
        %332 = vperm.xlu0 %331, %v281
        %v333 = vpop.permute.xlu0 %332
        %334 = vset.pattern.permute.xlu0 0
        %335 = vperm.xlu0 %334, %v282
        %v336 = vpop.permute.xlu0 %335
        %337 = vset.pattern.permute.xlu0 0
        %338 = vperm.xlu0 %337, %v283
        %v339 = vpop.permute.xlu0 %338
        %340 = vset.pattern.permute.xlu0 0
        %341 = vperm.xlu0 %340, %v284
        %v342 = vpop.permute.xlu0 %341
        %343 = vset.pattern.permute.xlu0 0
        %344 = vperm.xlu0 %343, %v285
        %v345 = vpop.permute.xlu0 %344
        %346 = vset.pattern.permute.xlu0 0
        %347 = vperm.xlu0 %346, %v286
        %v348 = vpop.permute.xlu0 %347
        %349 = vset.pattern.permute.xlu0 0
        %350 = vperm.xlu0 %349, %v287
        %v351 = vpop.permute.xlu0 %350
        %352 = vset.pattern.permute.xlu0 0
        %353 = vperm.xlu0 %352, %v288
        %v354 = vpop.permute.xlu0 %353
        %vm355 = vcmp.eq.s32.totalorder %v309, %v306
        %vm356 = vcmp.eq.s32.totalorder %v312, %v306
        %vm357 = vcmp.eq.s32.totalorder %v315, %v306
        %vm358 = vcmp.eq.s32.totalorder %v318, %v306
        %vm359 = vcmp.eq.s32.totalorder %v321, %v306
        %vm360 = vcmp.eq.s32.totalorder %v324, %v306
        %vm361 = vcmp.eq.s32.totalorder %v327, %v306
        %vm362 = vcmp.eq.s32.totalorder %v330, %v306
        %vm363 = vcmp.eq.s32.totalorder %v333, %v306
        %vm364 = vcmp.eq.s32.totalorder %v336, %v306
        %vm365 = vcmp.eq.s32.totalorder %v339, %v306
        %vm366 = vcmp.eq.s32.totalorder %v342, %v306
        %vm367 = vcmp.eq.s32.totalorder %v345, %v306
        %vm368 = vcmp.eq.s32.totalorder %v348, %v306
        %vm369 = vcmp.eq.s32.totalorder %v351, %v306
        %vm370 = vcmp.eq.s32.totalorder %v354, %v306
        %v371 = vsel %vm355, 1, 0
        %v372 = vsel %vm356, 1, 0
        %v373 = vsel %vm357, 1, 0
        %v374 = vsel %vm358, 1, 0
        %v375 = vsel %vm359, 1, 0
        %v376 = vsel %vm360, 1, 0
        %v377 = vsel %vm361, 1, 0
        %v378 = vsel %vm362, 1, 0
        %v379 = vsel %vm363, 1, 0
        %v380 = vsel %vm364, 1, 0
        %v381 = vsel %vm365, 1, 0
        %v382 = vsel %vm366, 1, 0
        %v383 = vsel %vm367, 1, 0
        %v384 = vsel %vm368, 1, 0
        %v385 = vsel %vm369, 1, 0
        %v386 = vsel %vm370, 1, 0
        %v387 = vcvt.s32.f32 %v371
        %v388 = vcvt.s32.f32 %v372
        %v389 = vcvt.s32.f32 %v373
        %v390 = vcvt.s32.f32 %v374
        %v391 = vcvt.s32.f32 %v375
        %v392 = vcvt.s32.f32 %v376
        %v393 = vcvt.s32.f32 %v377
        %v394 = vcvt.s32.f32 %v378
        %v395 = vcvt.s32.f32 %v379
        %v396 = vcvt.s32.f32 %v380
        %v397 = vcvt.s32.f32 %v381
        %v398 = vcvt.s32.f32 %v382
        %v399 = vcvt.s32.f32 %v383
        %v400 = vcvt.s32.f32 %v384
        %v401 = vcvt.s32.f32 %v385
        %v402 = vcvt.s32.f32 %v386
        %v403 = vpack.c.bf16 %v388, %v387
        %v404 = vpack.c.bf16 %v390, %v389
        %v405 = vpack.c.bf16 %v392, %v391
        %v406 = vpack.c.bf16 %v394, %v393
        %v407 = vpack.c.bf16 %v396, %v395
        %v408 = vpack.c.bf16 %v398, %v397
        %v409 = vpack.c.bf16 %v400, %v399
        %v410 = vpack.c.bf16 %v402, %v401
        %v411 = vpack.c.bf16 %v290, %v289
        %v412 = vpack.c.bf16 %v292, %v291
        %v413 = vpack.c.bf16 %v294, %v293
        %v414 = vpack.c.bf16 %v296, %v295
        %v415 = vpack.c.bf16 %v298, %v297
        %v416 = vpack.c.bf16 %v300, %v299
        %v417 = vpack.c.bf16 %v302, %v301
        %v418 = vpack.c.bf16 %v304, %v303
        %419 = vmatprep.subr.bf16.mxu0 0
        %420 = vmatpush1.bf16.msra.mxu0 %v411
        %421 = vmatprep.subr.bf16.mxu0 0
        %422 = vmatpush1.bf16.msra.mxu0 %v412
        %423 = vmatprep.subr.bf16.mxu0 0
        %424 = vmatpush1.bf16.msra.mxu0 %v413
        %425 = vmatprep.subr.bf16.mxu0 0
        %426 = vmatpush1.bf16.msra.mxu0 %v414
        %427 = vmatprep.subr.bf16.mxu0 0
        %428 = vmatpush1.bf16.msra.mxu0 %v415
        %429 = vmatprep.subr.bf16.mxu0 0
        %430 = vmatpush1.bf16.msra.mxu0 %v416
        %431 = vmatprep.subr.bf16.mxu0 0
        %432 = vmatpush1.bf16.msra.mxu0 %v417
        %433 = vmatprep.subr.bf16.mxu0 0
        %434 = vmatpush1.bf16.msra.mxu0 %v418
        %435 = vmatprep.subr.bf16.mxu0 0
        %436 = vmatpush1.bf16.msra.mxu0 0
        %437 = vmatprep.subr.bf16.mxu0 0
        %438 = vmatpush1.bf16.msra.mxu0 0
        %439 = vmatprep.subr.bf16.mxu0 0
        %440 = vmatpush1.bf16.msra.mxu0 0
        %441 = vmatprep.subr.bf16.mxu0 0
        %442 = vmatpush1.bf16.msra.mxu0 0
        %443 = vmatprep.subr.bf16.mxu0 0
        %444 = vmatpush1.bf16.msra.mxu0 0
        %445 = vmatprep.subr.bf16.mxu0 0
        %446 = vmatpush1.bf16.msra.mxu0 0
        %447 = vmatprep.subr.bf16.mxu0 0
        %448 = vmatpush1.bf16.msra.mxu0 0
        %449 = vmatprep.subr.bf16.mxu0 0
        %450 = vmatpush1.bf16.msra.mxu0 0
        %451 = vmatprep.mubr.bf16.mxu0 0
        %452 = vmatmul.mubr.bf16.gmra.mrb[0].mxu0 %v403
        %v453 = vpop.f32.mrb[0].mxu0
        %v454 = vadd.f32 0.0, %v453
        %v455 = vpop.f32.mrb[0].mxu0
        %v456 = vpop.f32.mrb[0].mxu0
        %v457 = vadd.f32 0.0, %v456
        %v458 = vpop.f32.mrb[0].mxu0
        %459 = vmatprep.mubr.bf16.mxu0 0
        %460 = vmatmul.mubr.bf16.gmra.mrb[0].mxu0 %v404
        %v461 = vpop.f32.mrb[0].mxu0
        %v462 = vadd.f32 0.0, %v461
        %v463 = vpop.f32.mrb[0].mxu0
        %v464 = vpop.f32.mrb[0].mxu0
        %v465 = vadd.f32 0.0, %v464
        %v466 = vpop.f32.mrb[0].mxu0
        %467 = vmatprep.mubr.bf16.mxu0 0
        %468 = vmatmul.mubr.bf16.gmra.mrb[0].mxu0 %v405
        %v469 = vpop.f32.mrb[0].mxu0
        %v470 = vadd.f32 0.0, %v469
        %v471 = vpop.f32.mrb[0].mxu0
        %v472 = vpop.f32.mrb[0].mxu0
        %v473 = vadd.f32 0.0, %v472
        %v474 = vpop.f32.mrb[0].mxu0
        %475 = vmatprep.mubr.bf16.mxu0 0
        %476 = vmatmul.mubr.bf16.gmra.mrb[0].mxu0 %v406
        %v477 = vpop.f32.mrb[0].mxu0
        %v478 = vadd.f32 0.0, %v477
        %v479 = vpop.f32.mrb[0].mxu0
        %v480 = vpop.f32.mrb[0].mxu0
        %v481 = vadd.f32 0.0, %v480
        %v482 = vpop.f32.mrb[0].mxu0
        %483 = vmatprep.mubr.bf16.mxu0 0
        %484 = vmatmul.mubr.bf16.gmra.mrb[0].mxu0 %v407
        %v485 = vpop.f32.mrb[0].mxu0
        %v486 = vadd.f32 0.0, %v485
        %v487 = vpop.f32.mrb[0].mxu0
        %v488 = vpop.f32.mrb[0].mxu0
        %v489 = vadd.f32 0.0, %v488
        %v490 = vpop.f32.mrb[0].mxu0
        %491 = vmatprep.mubr.bf16.mxu0 0
        %492 = vmatmul.mubr.bf16.gmra.mrb[0].mxu0 %v408
        %v493 = vpop.f32.mrb[0].mxu0
        %v494 = vadd.f32 0.0, %v493
        %v495 = vpop.f32.mrb[0].mxu0
        %v496 = vpop.f32.mrb[0].mxu0
        %v497 = vadd.f32 0.0, %v496
        %v498 = vpop.f32.mrb[0].mxu0
        %499 = vmatprep.mubr.bf16.mxu0 0
        %500 = vmatmul.mubr.bf16.gmra.mrb[0].mxu0 %v409
        %v501 = vpop.f32.mrb[0].mxu0
        %v502 = vadd.f32 0.0, %v501
        %v503 = vpop.f32.mrb[0].mxu0
        %v504 = vpop.f32.mrb[0].mxu0
        %v505 = vadd.f32 0.0, %v504
        %v506 = vpop.f32.mrb[0].mxu0
        %507 = vmatprep.mubr.bf16.mxu0 0
        %508 = vmatmul.mubr.bf16.gmra.mrb[0].mxu0 %v410
        %v509 = vpop.f32.mrb[0].mxu0
        %v510 = vadd.f32 0.0, %v509
        %v511 = vpop.f32.mrb[0].mxu0
        %v512 = vpop.f32.mrb[0].mxu0
        %v513 = vadd.f32 0.0, %v512
        %v514 = vpop.f32.mrb[0].mxu0
        %515 = vdwg.mxu0
        %v516 = vld [vmem:[#allocation8] sm:$0xff]
        %v517 = vld [vmem:[#allocation8 + $0x8] sm:$0xff]
        %v518 = vld [vmem:[#allocation8 + $0x10] sm:$0xff]
        %v519 = vld [vmem:[#allocation8 + $0x18] sm:$0xff]
        %v520 = vld [vmem:[#allocation8 + $0x20] sm:$0xff]
        %v521 = vld [vmem:[#allocation8 + $0x28] sm:$0xff]
        %v522 = vld [vmem:[#allocation8 + $0x30] sm:$0xff]
        %v523 = vld [vmem:[#allocation8 + $0x38] sm:$0xff]
        %v524 = vld [vmem:[#allocation8 + $0x40] sm:$0xff]
        %v525 = vld [vmem:[#allocation8 + $0x48] sm:$0xff]
        %v526 = vld [vmem:[#allocation8 + $0x50] sm:$0xff]
        %v527 = vld [vmem:[#allocation8 + $0x58] sm:$0xff]
        %v528 = vld [vmem:[#allocation8 + $0x60] sm:$0xff]
        %v529 = vld [vmem:[#allocation8 + $0x68] sm:$0xff]
        %v530 = vld [vmem:[#allocation8 + $0x70] sm:$0xff]
        %v531 = vld [vmem:[#allocation8 + $0x78] sm:$0xff]
        %v532 = vpack.c.bf16 %v457, %v454
        %v533 = vpack.c.bf16 %v465, %v462
        %v534 = vpack.c.bf16 %v473, %v470
        %v535 = vpack.c.bf16 %v481, %v478
        %v536 = vpack.c.bf16 %v489, %v486
        %v537 = vpack.c.bf16 %v497, %v494
        %v538 = vpack.c.bf16 %v505, %v502
        %v539 = vpack.c.bf16 %v513, %v510
        %v540 = vld [vmem:[%s227] sm:$0xf]
        %v541 = vld [vmem:[%s227 + $0x4] sm:$0xf]
        %v542 = vld [vmem:[%s227 + $0x8] sm:$0xf]
        %v543 = vld [vmem:[%s227 + $0xc] sm:$0xf]
        %v544 = vld [vmem:[%s227 + $0x10] sm:$0xf]
        %v545 = vld [vmem:[%s227 + $0x14] sm:$0xf]
        %v546 = vld [vmem:[%s227 + $0x18] sm:$0xf]
        %v547 = vld [vmem:[%s227 + $0x1c] sm:$0xf]
        %v548 = vld [vmem:[%s227 + $0x20] sm:$0xf]
        %v549 = vld [vmem:[%s227 + $0x24] sm:$0xf]
        %v550 = vld [vmem:[%s227 + $0x28] sm:$0xf]
        %v551 = vld [vmem:[%s227 + $0x2c] sm:$0xf]
        %v552 = vld [vmem:[%s227 + $0x30] sm:$0xf]
        %v553 = vld [vmem:[%s227 + $0x34] sm:$0xf]
        %v554 = vld [vmem:[%s227 + $0x38] sm:$0xf]
        %v555 = vld [vmem:[%s227 + $0x3c] sm:$0xf]
        %v572 = vunpack.c.l.b16 %v540
        %v573 = vunpack.c.l.b16 %v541
        %v574 = vunpack.c.l.b16 %v542
        %v575 = vunpack.c.l.b16 %v543
        %v576 = vunpack.c.l.b16 %v544
        %v577 = vunpack.c.l.b16 %v545
        %v578 = vunpack.c.l.b16 %v546
        %v579 = vunpack.c.l.b16 %v547
        %v580 = vunpack.c.l.b16 %v548
        %v581 = vunpack.c.l.b16 %v549
        %v582 = vunpack.c.l.b16 %v550
        %v583 = vunpack.c.l.b16 %v551
        %v584 = vunpack.c.l.b16 %v552
        %v585 = vunpack.c.l.b16 %v553
        %v586 = vunpack.c.l.b16 %v554
        %v587 = vunpack.c.l.b16 %v555
        %v588 = vpack.c.b16 %v573, %v572
        %v589 = vpack.c.b16 %v575, %v574
        %v590 = vpack.c.b16 %v577, %v576
        %v591 = vpack.c.b16 %v579, %v578
        %v592 = vpack.c.b16 %v581, %v580
        %v593 = vpack.c.b16 %v583, %v582
        %v594 = vpack.c.b16 %v585, %v584
        %v595 = vpack.c.b16 %v587, %v586
        %604 = vmatprep.subr.bf16.mxu0 0
        %605 = vmatpush1.bf16.msra.mxu0 %v588
        %606 = vmatprep.subr.bf16.mxu0 0
        %607 = vmatpush1.bf16.msra.mxu0 %v589
        %608 = vmatprep.subr.bf16.mxu0 0
        %609 = vmatpush1.bf16.msra.mxu0 %v590
        %610 = vmatprep.subr.bf16.mxu0 0
        %611 = vmatpush1.bf16.msra.mxu0 %v591
        %612 = vmatprep.subr.bf16.mxu0 0
        %613 = vmatpush1.bf16.msra.mxu0 %v592
        %614 = vmatprep.subr.bf16.mxu0 0
        %615 = vmatpush1.bf16.msra.mxu0 %v593
        %616 = vmatprep.subr.bf16.mxu0 0
        %617 = vmatpush1.bf16.msra.mxu0 %v594
        %618 = vmatprep.subr.bf16.mxu0 0
        %619 = vmatpush1.bf16.msra.mxu0 %v595
        %620 = vmatprep.subr.bf16.mxu0 0
        %621 = vmatpush1.bf16.msra.mxu0 0
        %622 = vmatprep.subr.bf16.mxu0 0
        %623 = vmatpush1.bf16.msra.mxu0 0
        %624 = vmatprep.subr.bf16.mxu0 0
        %625 = vmatpush1.bf16.msra.mxu0 0
        %626 = vmatprep.subr.bf16.mxu0 0
        %627 = vmatpush1.bf16.msra.mxu0 0
        %628 = vmatprep.subr.bf16.mxu0 0
        %629 = vmatpush1.bf16.msra.mxu0 0
        %630 = vmatprep.subr.bf16.mxu0 0
        %631 = vmatpush1.bf16.msra.mxu0 0
        %632 = vmatprep.subr.bf16.mxu0 0
        %633 = vmatpush1.bf16.msra.mxu0 0
        %634 = vmatprep.subr.bf16.mxu0 0
        %635 = vmatpush1.bf16.msra.mxu0 0
        %636 = vmatprep.mubr.bf16.mxu0 0
        %637 = vmatmul.mubr.bf16.gmra.mrb[0].mxu0 %v532
        %v638 = vpop.f32.mrb[0].mxu0
        %v639 = vadd.f32 0.0, %v638
        %v640 = vpop.f32.mrb[0].mxu0
        %v641 = vpop.f32.mrb[0].mxu0
        %v642 = vadd.f32 0.0, %v641
        %v643 = vpop.f32.mrb[0].mxu0
        %644 = vmatprep.mubr.bf16.mxu0 0
        %645 = vmatmul.mubr.bf16.gmra.mrb[0].mxu0 %v533
        %v646 = vpop.f32.mrb[0].mxu0
        %v647 = vadd.f32 0.0, %v646
        %v648 = vpop.f32.mrb[0].mxu0
        %v649 = vpop.f32.mrb[0].mxu0
        %v650 = vadd.f32 0.0, %v649
        %v651 = vpop.f32.mrb[0].mxu0
        %652 = vmatprep.mubr.bf16.mxu0 0
        %653 = vmatmul.mubr.bf16.gmra.mrb[0].mxu0 %v534
        %v654 = vpop.f32.mrb[0].mxu0
        %v655 = vadd.f32 0.0, %v654
        %v656 = vpop.f32.mrb[0].mxu0
        %v657 = vpop.f32.mrb[0].mxu0
        %v658 = vadd.f32 0.0, %v657
        %v659 = vpop.f32.mrb[0].mxu0
        %660 = vmatprep.mubr.bf16.mxu0 0
        %661 = vmatmul.mubr.bf16.gmra.mrb[0].mxu0 %v535
        %v662 = vpop.f32.mrb[0].mxu0
        %v663 = vadd.f32 0.0, %v662
        %v664 = vpop.f32.mrb[0].mxu0
        %v665 = vpop.f32.mrb[0].mxu0
        %v666 = vadd.f32 0.0, %v665
        %v667 = vpop.f32.mrb[0].mxu0
        %668 = vmatprep.mubr.bf16.mxu0 0
        %669 = vmatmul.mubr.bf16.gmra.mrb[0].mxu0 %v536
        %v670 = vpop.f32.mrb[0].mxu0
        %v671 = vadd.f32 0.0, %v670
        %v672 = vpop.f32.mrb[0].mxu0
        %v673 = vpop.f32.mrb[0].mxu0
        %v674 = vadd.f32 0.0, %v673
        %v675 = vpop.f32.mrb[0].mxu0
        %676 = vmatprep.mubr.bf16.mxu0 0
        %677 = vmatmul.mubr.bf16.gmra.mrb[0].mxu0 %v537
        %v678 = vpop.f32.mrb[0].mxu0
        %v679 = vadd.f32 0.0, %v678
        %v680 = vpop.f32.mrb[0].mxu0
        %v681 = vpop.f32.mrb[0].mxu0
        %v682 = vadd.f32 0.0, %v681
        %v683 = vpop.f32.mrb[0].mxu0
        %684 = vmatprep.mubr.bf16.mxu0 0
        %685 = vmatmul.mubr.bf16.gmra.mrb[0].mxu0 %v538
        %v686 = vpop.f32.mrb[0].mxu0
        %v687 = vadd.f32 0.0, %v686
        %v688 = vpop.f32.mrb[0].mxu0
        %v689 = vpop.f32.mrb[0].mxu0
        %v690 = vadd.f32 0.0, %v689
        %v691 = vpop.f32.mrb[0].mxu0
        %692 = vmatprep.mubr.bf16.mxu0 0
        %693 = vmatmul.mubr.bf16.gmra.mrb[0].mxu0 %v539
        %v694 = vpop.f32.mrb[0].mxu0
        %v695 = vadd.f32 0.0, %v694
        %v696 = vpop.f32.mrb[0].mxu0
        %v697 = vpop.f32.mrb[0].mxu0
        %v698 = vadd.f32 0.0, %v697
        %v699 = vpop.f32.mrb[0].mxu0
        %700 = vdwg.mxu0
        %v701 = vadd.f32 %v516, %v639
        %v702 = vadd.f32 %v517, %v642
        %v703 = vadd.f32 %v518, %v647
        %v704 = vadd.f32 %v519, %v650
        %v705 = vadd.f32 %v520, %v655
        %v706 = vadd.f32 %v521, %v658
        %v707 = vadd.f32 %v522, %v663
        %v708 = vadd.f32 %v523, %v666
        %v709 = vadd.f32 %v524, %v671
        %v710 = vadd.f32 %v525, %v674
        %v711 = vadd.f32 %v526, %v679
        %v712 = vadd.f32 %v527, %v682
        %v713 = vadd.f32 %v528, %v687
        %v714 = vadd.f32 %v529, %v690
        %v715 = vadd.f32 %v530, %v695
        %v716 = vadd.f32 %v531, %v698
        %717 = vst [vmem:[#allocation8] sm:$0xff] %v701
        %718 = vst [vmem:[#allocation8 + $0x8] sm:$0xff] %v702
        %719 = vst [vmem:[#allocation8 + $0x10] sm:$0xff] %v703
        %720 = vst [vmem:[#allocation8 + $0x18] sm:$0xff] %v704
        %721 = vst [vmem:[#allocation8 + $0x20] sm:$0xff] %v705
        %722 = vst [vmem:[#allocation8 + $0x28] sm:$0xff] %v706
        %723 = vst [vmem:[#allocation8 + $0x30] sm:$0xff] %v707
        %724 = vst [vmem:[#allocation8 + $0x38] sm:$0xff] %v708
        %725 = vst [vmem:[#allocation8 + $0x40] sm:$0xff] %v709
        %726 = vst [vmem:[#allocation8 + $0x48] sm:$0xff] %v710
        %727 = vst [vmem:[#allocation8 + $0x50] sm:$0xff] %v711
        %728 = vst [vmem:[#allocation8 + $0x58] sm:$0xff] %v712
        %729 = vst [vmem:[#allocation8 + $0x60] sm:$0xff] %v713
        %730 = vst [vmem:[#allocation8 + $0x68] sm:$0xff] %v714
        %731 = vst [vmem:[#allocation8 + $0x70] sm:$0xff] %v715
        %732 = vst [vmem:[#allocation8 + $0x78] sm:$0xff] %v716
        // Predicated region
        $region49: #{tpu_custom_call.1} parent=31 // pred_check
          %p733 = pneg %p124
        $region50: #{tpu_custom_call.1} parent=31 // pred_check_branch
          %735 = sbr.rel (%p733) target = $region52
        $region51: #{tpu_custom_call.1} parent=31 // pred_region
          %s736 = smul.u32 16, %s23
          %s738 = ssub.s32 2048, 2048
          %739 = vsyncadd [#allocation4], %s738
          %s740 = smul.addr %s736, 128
          %s741 = scalar_lea.hbm %s3, %s740
          %s742 = sshll.u32 [#allocation8], 4
          %s743 = int_to_ptr.vmem [resolvable:$true] %s742
          %748 = dma.vmem_to_hbm [thread:$0]  %s743, 2048, %s741, [#allocation4], 128, 128, 8
        $region52: #{tpu_custom_call.1} parent=31 // pred_fallthru
          _
        // Predicated region
        $region53: #{tpu_custom_call.1} parent=31 // pred_check
          %p749 = pneg %p124
        $region54: #{tpu_custom_call.1} parent=31 // pred_check_branch
          %751 = sbr.rel (%p749) target = $region56
        $region55: #{tpu_custom_call.1} parent=31 // pred_region
          %752 = dma.done [#allocation4], 2048
        $region56: #{tpu_custom_call.1} parent=31 // pred_fallthru
          _
      $region32: #{tpu_custom_call.1} parent=5 // pred_fallthru
        _
      %p753 = scmp.le.s32.totalorder 2, %s14
      // Predicated region
      $region57: #{tpu_custom_call.1} parent=5 // pred_check
        %p754 = pneg %p753
      $region58: #{tpu_custom_call.1} parent=5 // pred_check_branch
        %756 = sbr.rel (%p754) target = $region60
      $region59: #{tpu_custom_call.1} parent=5 // pred_region
        %s757 = ssub.s32 %s14, 2
      $region60: #{tpu_custom_call.1} parent=5 // pred_fallthru
        _
    $region6: #{tpu_custom_call.1} parent=1 // loop_footer
      %s18 = sadd.s32 1, %s14
    $region7: #{tpu_custom_call.1} parent=1 // loop_footer_branch
      %13 = sbr.rel target = $region3
    $region8: #{tpu_custom_call.1} parent=1 // loop_exit
      _
    %758 = vsyncpa [#allocation3], 1
    %s759 = scalar_lea.sflag [#allocation3], 1
    %760 = vsyncpa %s759, 1
    %761 = vsyncpa [#allocation6], 1
    %762 = vsyncpa [#allocation4], 1
    %s763 = scalar_lea.sflag [#allocation4], 1
    %764 = vsyncpa %s763, 1

</llo_original>
